<compile_context>
chip_gen: v7x
topology: tpu7x:2x2x1
jax: 0.10.0
libtpu: 0.0.40
codegen_flags: <defaults>
</compile_context>

<pallas_src>
import functools

import jax
import jax.numpy as jnp
from jax import lax
from jax.experimental import pallas as pl
from jax.experimental.pallas import tpu as pltpu


def _instance_loss_tile_kernel(*refs, temperature, k_num, batch, batch_pad,
                               tile_r, sub_tiles, use_pos):
    if use_pos:
        zi_ref, zj_ref, ziT_ref, zjT_ref, lab_col_ref, lab_row_ref, out_ref = refs
    else:
        zi_ref, zj_ref, ziT_ref, zjT_ref, out_ref = refs

    B = batch                       # real batch size (loss math uses this)
    Bp = batch_pad                  # padded batch size (tile / column extent)
    N = 2 * B
    inv_t = jnp.float32(1.0 / temperature)
    sub_r = tile_r // sub_tiles

    # MXU RHS operands, already in (K, N) = (D, Bp) layout — no XLU transpose.
    ziT = ziT_ref[...]
    zjT = zjT_ref[...]
    if use_pos:
        lab_row = lab_row_ref[...]                      # (1, Bp)

    tile_start = pl.program_id(0) * tile_r
    dn = (((1,), (0,)), ((), ()))                       # contract D (lhs dim 1, rhs dim 0)
    n_neg = jnp.float32(N - k_num - 1)                  # kept negative logits, all exactly 0
    kf = jnp.float32(k_num)
    big_neg = jnp.float32(-1e30)
    sentinel = jnp.int32(Bp)

    def soft_ce_rows(vals):
        # CrossEntropyLoss(sum) with soft targets (k_num ones on the positives):
        # -sum(pos) + k_num * logsumexp(pos ∪ zero-negatives); O(k_num) exps/row,
        # the N-k_num-1 kept negatives are exactly 0 -> closed form (N-k-1)*exp(-m).
        s_pos = vals[0]
        m = jnp.maximum(vals[0], 0.0)
        for v in vals[1:]:
            s_pos = s_pos + v
            m = jnp.maximum(m, v)
        acc = n_neg * jnp.exp(-m)
        for v in vals:
            acc = acc + jnp.exp(v - m)
        return -s_pos + kf * (m + jnp.log(acc))         # (sub_r, 1)

    tile_total = jnp.zeros((1, 1), jnp.float32)

    # Static unroll over independent row sub-tiles: gives the packer two
    # independent MXU -> VPU/XLU chains to interleave.
    for st in range(sub_tiles):
        r0 = st * sub_r
        zi_t = zi_ref[r0:r0 + sub_r, :]                 # (sub_r, D)
        zj_t = zj_ref[r0:r0 + sub_r, :]

        sim1 = lax.dot_general(zi_t, zjT, dn,
                               preferred_element_type=jnp.float32) * inv_t
        sim1t = lax.dot_general(zj_t, ziT, dn,
                                preferred_element_type=jnp.float32) * inv_t

        cols = lax.broadcasted_iota(jnp.int32, (sub_r, Bp), 1)
        rows = tile_start + r0 + lax.broadcasted_iota(jnp.int32, (sub_r, Bp), 0)
        diag = cols == rows

        if use_pos:
            lab_c = lab_col_ref[r0:r0 + sub_r, :]       # (sub_r, 1)
            pos = lab_c == lab_row                      # (sub_r, Bp), built on the VPU
            x = jnp.where(diag, jnp.float32(-999.0), jnp.where(pos, sim1, 0.0))
        else:
            x = jnp.where(diag, jnp.float32(-999.0), sim1)
        if Bp > B:
            x = jnp.where(cols < B, x, big_neg)         # padded columns never selected

        # Diagonal logit z_i[r].z_j[r]/T — cheap (sub_r, D) row reduce.
        diag_val = jnp.sum(zi_t.astype(jnp.float32) * zj_t.astype(jnp.float32),
                           axis=1, keepdims=True) * inv_t

        vals_top = [diag_val]
        vals_bot = [diag_val]
        for _ in range(k_num - 1):                      # iterative argmax == topk
            row_max = jnp.max(x, axis=1, keepdims=True)
            # First (lowest-column) argmax — exact-zero ties are common under
            # pos masking, so the tie-break reduce must match argmax-first.
            first_idx = jnp.min(jnp.where(x == row_max, cols, sentinel),
                                axis=1, keepdims=True)
            onehot = cols == first_idx
            if use_pos:
                v_top = jnp.sum(jnp.where(onehot, sim1, 0.0), axis=1, keepdims=True)
            else:
                v_top = row_max                         # x == sim1 at the argmax
            v_bot = jnp.sum(jnp.where(onehot, sim1t, 0.0), axis=1, keepdims=True)
            # TODO(synk): pltpu.pack_elementwise bf16-packed extraction would fuse
            # these two masked sums into one reduce, at bf16 rounding of the logits.
            vals_top.append(v_top)
            vals_bot.append(v_bot)
            x = jnp.where(onehot, big_neg, x)

        loss_rows = soft_ce_rows(vals_top) + soft_ce_rows(vals_bot)
        if Bp > B:                                      # mask padded rows out of the loss
            row_ids = tile_start + r0 + lax.broadcasted_iota(jnp.int32, (sub_r, 1), 0)
            loss_rows = jnp.where(row_ids < B, loss_rows, 0.0)
        tile_total = tile_total + jnp.sum(loss_rows, keepdims=True)

    out_ref[0] = jnp.broadcast_to(tile_total, (8, 128))  # lane-dense partial


def _vmem_budget_bytes():
    cap = None
    try:
        cap = getattr(pltpu.get_tpu_info(), "vmem_capacity_bytes", None)
    except Exception:
        cap = None
    if not cap:
        cap = 64 * 1024 * 1024          # conservative fallback (v7x per-core VMEM)
    return int(cap * 0.8)               # leave headroom below the physical capacity


def _pick_tile_r(B_pad, D, itemsize, budget):
    fixed = 2 * D * B_pad * itemsize                    # resident z_i^T / z_j^T, 1 buffer each
    small = 256 * 1024                                  # labels, outputs, slack

    def need(tr):
        tiled = 2 * 2 * tr * D * itemsize               # z_i / z_j row tiles, double-buffered
        temps = 10 * tr * B_pad * 4                     # live f32/i32 (tr, B_pad) temporaries
        return fixed + tiled + temps + small

    cands = [d for d in range(8, B_pad + 1, 8) if B_pad % d == 0]
    if B_pad >= 16:                                     # keep >= 2 grid steps (v7x megacore)
        cands = [d for d in cands if d <= B_pad // 2] or [8]
    if not cands:
        cands = [B_pad]
    cands = sorted(cands, reverse=True)
    for c in cands:
        if need(c) <= budget:
            return c
    return cands[-1]


def _resident_spec(shape):
    # Constant-index blocks: one VMEM buffer is enough (the block never changes).
    try:
        return pl.BlockSpec(shape, lambda i: (0, 0), pipeline_mode=pl.Buffered(1))
    except TypeError:                                   # older API without pipeline_mode
        return pl.BlockSpec(shape, lambda i: (0, 0))


def instance_loss(z_i, z_j, pseudo_label, epoch, epoch_limit, *,
                  temperature, k_num, tile_r=None, mxu_dtype=None):
    # NOTE: `epoch` / `epoch_limit` must be concrete Python values — the pos-mask
    # branch is resolved at trace time, mirroring the PyTorch module's `if`.
    B, D = z_i.shape
    N = 2 * B
    use_pos = bool(epoch > epoch_limit)

    if mxu_dtype is not None:                           # optional bf16 MXU feed
        z_i = z_i.astype(mxu_dtype)
        z_j = z_j.astype(mxu_dtype)
    itemsize = jnp.dtype(z_i.dtype).itemsize

    # Pad the batch to a multiple of 8; padded rows/cols are masked in-kernel.
    B_pad = ((B + 7) // 8) * 8
    if B_pad != B:
        z_i = jnp.pad(z_i, ((0, B_pad - B), (0, 0)))
        z_j = jnp.pad(z_j, ((0, B_pad - B), (0, 0)))

    budget = _vmem_budget_bytes()
    if tile_r is None:
        tile_r = _pick_tile_r(B_pad, D, itemsize, budget)
    assert B_pad % tile_r == 0, "tile_r must divide the (padded) batch size"
    num_tiles = B_pad // tile_r
    sub_tiles = 2 if tile_r % 16 == 0 else 1

    # Pre-transpose once in HBM so the MXU RHS is consumed in (K, N) layout.
    z_iT = z_i.T                                        # (D, B_pad)
    z_jT = z_j.T
    # TODO(synk): stream z^T in column tiles (extra grid axis + cross-tile top-k
    # merge) when 2*D*B_pad*itemsize exceeds ~40% of VMEM (relevant on v7x).

    kernel = functools.partial(
        _instance_loss_tile_kernel,
        temperature=float(temperature), k_num=int(k_num), batch=B,
        batch_pad=B_pad, tile_r=tile_r, sub_tiles=sub_tiles, use_pos=use_pos)

    in_specs = [
        pl.BlockSpec((tile_r, D), lambda i: (i, 0)),    # z_i rows (this tile)
        pl.BlockSpec((tile_r, D), lambda i: (i, 0)),    # z_j rows (this tile)
        _resident_spec((D, B_pad)),                     # z_i^T resident (MXU RHS)
        _resident_spec((D, B_pad)),                     # z_j^T resident (MXU RHS)
    ]
    args = [z_i, z_j, z_iT, z_jT]
    if use_pos:
        lab = pseudo_label.astype(jnp.int32).reshape(B, 1)
        if B_pad != B:
            lab = jnp.pad(lab, ((0, B_pad - B), (0, 0)), constant_values=-1)
        args += [lab, lab.reshape(1, B_pad)]
        in_specs += [
            pl.BlockSpec((tile_r, 1), lambda i: (i, 0)),   # this tile's labels (rows)
            pl.BlockSpec((1, B_pad), lambda i: (0, 0)),    # all labels (columns)
        ]

    out = pl.pallas_call(
        kernel,
        out_shape=jax.ShapeDtypeStruct((num_tiles, 8, 128), jnp.float32),
        grid=(num_tiles,),
        in_specs=in_specs,
        out_specs=pl.BlockSpec((1, 8, 128), lambda i: (i, 0, 0)),
        compiler_params=pltpu.CompilerParams(
            dimension_semantics=("parallel",),
            vmem_limit_bytes=int(budget)),
    )(*args)
    return jnp.sum(out[:, 0, 0]) / jnp.float32(N * k_num)


def _reference_loss(z_i, z_j, pseudo_label, epoch, epoch_limit, temperature, k_num):
    # Pure-JAX reference mirroring the PyTorch semantics.
    B = z_i.shape[0]
    N = 2 * B
    sim1 = (z_i @ z_j.T) / temperature
    if epoch > epoch_limit:
        pos = (pseudo_label[None, :] == pseudo_label[:, None]).astype(jnp.float32)
        x = sim1 * pos
    else:
        x = sim1
    ar = jnp.arange(B)
    x = x.at[ar, ar].set(-999.0)
    brother = jnp.zeros((B, B), jnp.float32)
    for _ in range(k_num - 1):
        idx = jnp.argmax(x, axis=1)
        brother = brother.at[ar, idx].set(1.0)
        x = x.at[ar, idx].set(-1e30)
    brother_new = jnp.maximum(brother, jnp.eye(B, dtype=jnp.float32))

    z = jnp.concatenate([z_i, z_j], axis=0)
    sim = (z @ z.T) / temperature
    sim = jnp.where(sim == 0.0, 1e-45, sim)
    zeros = jnp.zeros((B, B), jnp.float32)
    w_final = jnp.concatenate(
        [jnp.concatenate([zeros, brother_new], 1),
         jnp.concatenate([brother_new, zeros], 1)], 0)
    w_sim = w_final * sim
    mask = w_final > 0.0
    sum_pos = jnp.sum(jnp.where(mask, w_sim, 0.0), axis=1)
    masked = jnp.where(mask, w_sim, -jnp.inf)
    m = jnp.maximum(jnp.max(masked, axis=1), 0.0)
    s = jnp.sum(jnp.exp(masked - m[:, None]), axis=1) + (N - k_num - 1) * jnp.exp(-m)
    lse = m + jnp.log(s)
    loss = jnp.sum(-sum_pos + k_num * lse) / (N * k_num)
    return loss


if __name__ == "__main__":
    TEMPERATURE = 0.5
    K_NUM = 3
    EPOCH_LIMIT = 3

    def make_inputs(batch, dim, key):
        k1, k2, k3 = jax.random.split(key, 3)
        zi = jax.random.normal(k1, (batch, dim), dtype=jnp.float32)
        zj = jax.random.normal(k2, (batch, dim), dtype=jnp.float32)
        lab = jax.random.randint(k3, (batch,), 0, 3, dtype=jnp.int32)
        return zi, zj, lab

    # 1) f32 feed, batch a multiple of 8 (no padding): pos-mask and plain variants.
    z_i, z_j, lab = make_inputs(8, 32, jax.random.PRNGKey(0))
    for epoch in (5, 2):
        loss = jax.block_until_ready(
            instance_loss(z_i, z_j, lab, epoch, EPOCH_LIMIT,
                          temperature=TEMPERATURE, k_num=K_NUM))
        ref = jax.block_until_ready(
            _reference_loss(z_i, z_j, lab, epoch, EPOCH_LIMIT, TEMPERATURE, K_NUM))
        assert jnp.isfinite(loss), f"non-finite loss at epoch={epoch}: {loss}"
        assert jnp.allclose(loss, ref, rtol=1e-4, atol=1e-4), \
            f"epoch={epoch}: mismatch {loss} vs {ref}"

    # 2) batch NOT a multiple of 8: exercises the pad-and-mask path.
    z_i6, z_j6, lab6 = make_inputs(6, 32, jax.random.PRNGKey(1))
    for epoch in (5, 2):
        loss = jax.block_until_ready(
            instance_loss(z_i6, z_j6, lab6, epoch, EPOCH_LIMIT,
                          temperature=TEMPERATURE, k_num=K_NUM))
        ref = jax.block_until_ready(
            _reference_loss(z_i6, z_j6, lab6, epoch, EPOCH_LIMIT, TEMPERATURE, K_NUM))
        assert jnp.isfinite(loss), f"non-finite padded loss at epoch={epoch}: {loss}"
        assert jnp.allclose(loss, ref, rtol=1e-4, atol=1e-4), \
            f"padded epoch={epoch}: mismatch {loss} vs {ref}"

    # 3) bf16 MXU feed (perf option): compare against the reference evaluated on
    #    bf16-rounded inputs (the only difference vs. f32 is input rounding).
    z_i_bf = z_i.astype(jnp.bfloat16).astype(jnp.float32)
    z_j_bf = z_j.astype(jnp.bfloat16).astype(jnp.float32)
    loss = jax.block_until_ready(
        instance_loss(z_i, z_j, lab, 5, EPOCH_LIMIT, temperature=TEMPERATURE,
                      k_num=K_NUM, mxu_dtype=jnp.bfloat16))
    ref = jax.block_until_ready(
        _reference_loss(z_i_bf, z_j_bf, lab, 5, EPOCH_LIMIT, TEMPERATURE, K_NUM))
    assert jnp.isfinite(loss), f"non-finite bf16 loss: {loss}"
    assert jnp.allclose(loss, ref, rtol=5e-3, atol=5e-3), \
        f"bf16 feed: mismatch {loss} vs {ref}"

    print("KERNEL_OK")
</pallas_src>

<mosaic_0001>
module attributes {stable_mosaic.version = 11 : i64} {
  func.func @_instance_loss_tile_kernel(%arg0: i32, %arg1: memref<8x32xf32, #tpu.memory_space<vmem>>, %arg2: memref<8x32xf32, #tpu.memory_space<vmem>>, %arg3: memref<32x8xf32, #tpu.memory_space<vmem>>, %arg4: memref<32x8xf32, #tpu.memory_space<vmem>>, %arg5: memref<8x1xi32, #tpu.memory_space<vmem>>, %arg6: memref<1x8xi32, #tpu.memory_space<vmem>>, %arg7: memref<1x8x128xf32, #tpu.memory_space<vmem>>) attributes {dimension_semantics = [#tpu.dimension_semantics<parallel>], iteration_bounds = array<i64: 1>, scalar_prefetch = 0 : i64, scratch_operands = 0 : i64, tpu.core_type = #tpu.core_type<tc>, window_params = [{transform_indices = @transform_0, window_bounds = array<i64: 8, 32>}, {transform_indices = @transform_1, window_bounds = array<i64: 8, 32>}, {pipeline_mode = #tpu.pipeline_mode<synchronous>, transform_indices = @transform_2, window_bounds = array<i64: 32, 8>}, {pipeline_mode = #tpu.pipeline_mode<synchronous>, transform_indices = @transform_3, window_bounds = array<i64: 32, 8>}, {transform_indices = @transform_4, window_bounds = array<i64: 8, 1>}, {pipeline_mode = #tpu.pipeline_mode<synchronous>, transform_indices = @transform_5, window_bounds = array<i64: 1, 8>}, {transform_indices = @transform_6, window_bounds = array<i64: 1, 8, 128>}]} {
    %c0 = arith.constant 0 : index
    %c0_0 = arith.constant 0 : index
    %0 = vector.load %arg3[%c0, %c0_0] : memref<32x8xf32, #tpu.memory_space<vmem>>, vector<32x8xf32>
    %c0_1 = arith.constant 0 : index
    %c0_2 = arith.constant 0 : index
    %1 = vector.load %arg4[%c0_1, %c0_2] : memref<32x8xf32, #tpu.memory_space<vmem>>, vector<32x8xf32>
    %c0_3 = arith.constant 0 : index
    %c0_4 = arith.constant 0 : index
    %2 = vector.load %arg6[%c0_3, %c0_4] : memref<1x8xi32, #tpu.memory_space<vmem>>, vector<1x8xi32>
    %c8_i32 = arith.constant 8 : i32
    %3 = arith.muli %arg0, %c8_i32 : i32
    %cst = arith.constant 0.000000e+00 : f32
    %4 = vector.broadcast %cst : f32 to vector<1x1xf32>
    %c0_5 = arith.constant 0 : index
    %c0_6 = arith.constant 0 : index
    %5 = vector.load %arg1[%c0_5, %c0_6] : memref<8x32xf32, #tpu.memory_space<vmem>>, vector<8x32xf32>
    %c0_7 = arith.constant 0 : index
    %c0_8 = arith.constant 0 : index
    %6 = vector.load %arg2[%c0_7, %c0_8] : memref<8x32xf32, #tpu.memory_space<vmem>>, vector<8x32xf32>
    %cst_9 = arith.constant dense<0.000000e+00> : vector<8x8xf32>
    %7 = tpu.matmul %5, %1, %cst_9 {dimension_numbers = #tpu.dot_dimension_numbers<[1], [0], [0], [1], [0, 0, 1, 1], [], []>} : vector<8x32xf32>, vector<32x8xf32>, vector<8x8xf32> -> vector<8x8xf32>
    %cst_10 = arith.constant 2.000000e+00 : f32
    %8 = vector.broadcast %cst_10 : f32 to vector<8x8xf32>
    %9 = arith.mulf %7, %8 : vector<8x8xf32>
    %cst_11 = arith.constant dense<0.000000e+00> : vector<8x8xf32>
    %10 = tpu.matmul %6, %0, %cst_11 {dimension_numbers = #tpu.dot_dimension_numbers<[1], [0], [0], [1], [0, 0, 1, 1], [], []>} : vector<8x32xf32>, vector<32x8xf32>, vector<8x8xf32> -> vector<8x8xf32>
    %cst_12 = arith.constant 2.000000e+00 : f32
    %11 = vector.broadcast %cst_12 : f32 to vector<8x8xf32>
    %12 = arith.mulf %10, %11 : vector<8x8xf32>
    %13 = tpu.iota {dimensions = array<i32: 1>} : vector<8x8xi32>
    %c0_i32 = arith.constant 0 : i32
    %14 = arith.addi %3, %c0_i32 : i32
    %15 = tpu.iota {dimensions = array<i32: 0>} : vector<8x8xi32>
    %16 = vector.broadcast %14 : i32 to vector<8x8xi32>
    %17 = arith.addi %16, %15 : vector<8x8xi32>
    %18 = arith.cmpi eq, %13, %17 : vector<8x8xi32>
    %c0_13 = arith.constant 0 : index
    %c0_14 = arith.constant 0 : index
    %19 = vector.load %arg5[%c0_13, %c0_14] : memref<8x1xi32, #tpu.memory_space<vmem>>, vector<8x1xi32>
    %20 = vector.broadcast %19 : vector<8x1xi32> to vector<8x8xi32>
    %21 = vector.broadcast %2 : vector<1x8xi32> to vector<8x8xi32>
    %22 = arith.cmpi eq, %20, %21 : vector<8x8xi32>
    %cst_15 = arith.constant 0.000000e+00 : f32
    %23 = vector.broadcast %cst_15 : f32 to vector<8x8xf32>
    %24 = arith.select %22, %9, %23 : vector<8x8xi1>, vector<8x8xf32>
    %cst_16 = arith.constant -9.990000e+02 : f32
    %25 = vector.broadcast %cst_16 : f32 to vector<8x8xf32>
    %26 = arith.select %18, %25, %24 : vector<8x8xi1>, vector<8x8xf32>
    %27 = arith.mulf %5, %6 : vector<8x32xf32>
    %cst_17 = arith.constant dense<0.000000e+00> : vector<8xf32>
    %28 = vector.multi_reduction <add>, %27, %cst_17 [1] : vector<8x32xf32> to vector<8xf32>
    %29 = vector.shape_cast %28 : vector<8xf32> to vector<8x1xf32>
    %cst_18 = arith.constant 2.000000e+00 : f32
    %30 = vector.broadcast %cst_18 : f32 to vector<8x1xf32>
    %31 = arith.mulf %29, %30 : vector<8x1xf32>
    %cst_19 = arith.constant dense<0xFF800000> : vector<8xf32>
    %32 = vector.multi_reduction <maximumf>, %26, %cst_19 [1] : vector<8x8xf32> to vector<8xf32>
    %33 = vector.shape_cast %32 : vector<8xf32> to vector<8x1xf32>
    %34 = vector.broadcast %33 : vector<8x1xf32> to vector<8x8xf32>
    %35 = arith.cmpf oeq, %26, %34 : vector<8x8xf32>
    %c8_i32_20 = arith.constant 8 : i32
    %36 = vector.broadcast %c8_i32_20 : i32 to vector<8x8xi32>
    %37 = arith.select %35, %13, %36 : vector<8x8xi1>, vector<8x8xi32>
    %cst_21 = arith.constant dense<2147483647> : vector<8xi32>
    %38 = vector.multi_reduction <minsi>, %37, %cst_21 [1] : vector<8x8xi32> to vector<8xi32>
    %39 = vector.shape_cast %38 : vector<8xi32> to vector<8x1xi32>
    %40 = vector.broadcast %39 : vector<8x1xi32> to vector<8x8xi32>
    %41 = arith.cmpi eq, %13, %40 : vector<8x8xi32>
    %cst_22 = arith.constant 0.000000e+00 : f32
    %42 = vector.broadcast %cst_22 : f32 to vector<8x8xf32>
    %43 = arith.select %41, %9, %42 : vector<8x8xi1>, vector<8x8xf32>
    %cst_23 = arith.constant dense<0.000000e+00> : vector<8xf32>
    %44 = vector.multi_reduction <add>, %43, %cst_23 [1] : vector<8x8xf32> to vector<8xf32>
    %45 = vector.shape_cast %44 : vector<8xf32> to vector<8x1xf32>
    %cst_24 = arith.constant 0.000000e+00 : f32
    %46 = vector.broadcast %cst_24 : f32 to vector<8x8xf32>
    %47 = arith.select %41, %12, %46 : vector<8x8xi1>, vector<8x8xf32>
    %cst_25 = arith.constant dense<0.000000e+00> : vector<8xf32>
    %48 = vector.multi_reduction <add>, %47, %cst_25 [1] : vector<8x8xf32> to vector<8xf32>
    %49 = vector.shape_cast %48 : vector<8xf32> to vector<8x1xf32>
    %cst_26 = arith.constant -1.000000e+30 : f32
    %50 = vector.broadcast %cst_26 : f32 to vector<8x8xf32>
    %51 = arith.select %41, %50, %26 : vector<8x8xi1>, vector<8x8xf32>
    %cst_27 = arith.constant dense<0xFF800000> : vector<8xf32>
    %52 = vector.multi_reduction <maximumf>, %51, %cst_27 [1] : vector<8x8xf32> to vector<8xf32>
    %53 = vector.shape_cast %52 : vector<8xf32> to vector<8x1xf32>
    %54 = vector.broadcast %53 : vector<8x1xf32> to vector<8x8xf32>
    %55 = arith.cmpf oeq, %51, %54 : vector<8x8xf32>
    %c8_i32_28 = arith.constant 8 : i32
    %56 = vector.broadcast %c8_i32_28 : i32 to vector<8x8xi32>
    %57 = arith.select %55, %13, %56 : vector<8x8xi1>, vector<8x8xi32>
    %cst_29 = arith.constant dense<2147483647> : vector<8xi32>
    %58 = vector.multi_reduction <minsi>, %57, %cst_29 [1] : vector<8x8xi32> to vector<8xi32>
    %59 = vector.shape_cast %58 : vector<8xi32> to vector<8x1xi32>
    %60 = vector.broadcast %59 : vector<8x1xi32> to vector<8x8xi32>
    %61 = arith.cmpi eq, %13, %60 : vector<8x8xi32>
    %cst_30 = arith.constant 0.000000e+00 : f32
    %62 = vector.broadcast %cst_30 : f32 to vector<8x8xf32>
    %63 = arith.select %61, %9, %62 : vector<8x8xi1>, vector<8x8xf32>
    %cst_31 = arith.constant dense<0.000000e+00> : vector<8xf32>
    %64 = vector.multi_reduction <add>, %63, %cst_31 [1] : vector<8x8xf32> to vector<8xf32>
    %65 = vector.shape_cast %64 : vector<8xf32> to vector<8x1xf32>
    %cst_32 = arith.constant 0.000000e+00 : f32
    %66 = vector.broadcast %cst_32 : f32 to vector<8x8xf32>
    %67 = arith.select %61, %12, %66 : vector<8x8xi1>, vector<8x8xf32>
    %cst_33 = arith.constant dense<0.000000e+00> : vector<8xf32>
    %68 = vector.multi_reduction <add>, %67, %cst_33 [1] : vector<8x8xf32> to vector<8xf32>
    %69 = vector.shape_cast %68 : vector<8xf32> to vector<8x1xf32>
    %cst_34 = arith.constant 0.000000e+00 : f32
    %70 = vector.broadcast %cst_34 : f32 to vector<8x1xf32>
    %71 = arith.maximumf %31, %70 : vector<8x1xf32>
    %72 = arith.addf %31, %45 : vector<8x1xf32>
    %73 = arith.maximumf %71, %45 : vector<8x1xf32>
    %74 = arith.addf %72, %65 : vector<8x1xf32>
    %75 = arith.maximumf %73, %65 : vector<8x1xf32>
    %cst_35 = arith.constant 0.000000e+00 : f32
    %76 = vector.broadcast %cst_35 : f32 to vector<8x1xf32>
    %77 = arith.subf %76, %75 : vector<8x1xf32>
    %78 = math.exp %77 : vector<8x1xf32>
    %cst_36 = arith.constant 1.200000e+01 : f32
    %79 = vector.broadcast %cst_36 : f32 to vector<8x1xf32>
    %80 = arith.mulf %79, %78 : vector<8x1xf32>
    %81 = arith.subf %31, %75 : vector<8x1xf32>
    %82 = math.exp %81 : vector<8x1xf32>
    %83 = arith.addf %80, %82 : vector<8x1xf32>
    %84 = arith.subf %45, %75 : vector<8x1xf32>
    %85 = math.exp %84 : vector<8x1xf32>
    %86 = arith.addf %83, %85 : vector<8x1xf32>
    %87 = arith.subf %65, %75 : vector<8x1xf32>
    %88 = math.exp %87 : vector<8x1xf32>
    %89 = arith.addf %86, %88 : vector<8x1xf32>
    %cst_37 = arith.constant 0.000000e+00 : f32
    %90 = vector.broadcast %cst_37 : f32 to vector<8x1xf32>
    %91 = arith.subf %90, %74 : vector<8x1xf32>
    %92 = math.log %89 : vector<8x1xf32>
    %93 = arith.addf %75, %92 : vector<8x1xf32>
    %cst_38 = arith.constant 3.000000e+00 : f32
    %94 = vector.broadcast %cst_38 : f32 to vector<8x1xf32>
    %95 = arith.mulf %94, %93 : vector<8x1xf32>
    %96 = arith.addf %91, %95 : vector<8x1xf32>
    %cst_39 = arith.constant 0.000000e+00 : f32
    %97 = vector.broadcast %cst_39 : f32 to vector<8x1xf32>
    %98 = arith.maximumf %31, %97 : vector<8x1xf32>
    %99 = arith.addf %31, %49 : vector<8x1xf32>
    %100 = arith.maximumf %98, %49 : vector<8x1xf32>
    %101 = arith.addf %99, %69 : vector<8x1xf32>
    %102 = arith.maximumf %100, %69 : vector<8x1xf32>
    %cst_40 = arith.constant 0.000000e+00 : f32
    %103 = vector.broadcast %cst_40 : f32 to vector<8x1xf32>
    %104 = arith.subf %103, %102 : vector<8x1xf32>
    %105 = math.exp %104 : vector<8x1xf32>
    %cst_41 = arith.constant 1.200000e+01 : f32
    %106 = vector.broadcast %cst_41 : f32 to vector<8x1xf32>
    %107 = arith.mulf %106, %105 : vector<8x1xf32>
    %108 = arith.subf %31, %102 : vector<8x1xf32>
    %109 = math.exp %108 : vector<8x1xf32>
    %110 = arith.addf %107, %109 : vector<8x1xf32>
    %111 = arith.subf %49, %102 : vector<8x1xf32>
    %112 = math.exp %111 : vector<8x1xf32>
    %113 = arith.addf %110, %112 : vector<8x1xf32>
    %114 = arith.subf %69, %102 : vector<8x1xf32>
    %115 = math.exp %114 : vector<8x1xf32>
    %116 = arith.addf %113, %115 : vector<8x1xf32>
    %cst_42 = arith.constant 0.000000e+00 : f32
    %117 = vector.broadcast %cst_42 : f32 to vector<8x1xf32>
    %118 = arith.subf %117, %101 : vector<8x1xf32>
    %119 = math.log %116 : vector<8x1xf32>
    %120 = arith.addf %102, %119 : vector<8x1xf32>
    %cst_43 = arith.constant 3.000000e+00 : f32
    %121 = vector.broadcast %cst_43 : f32 to vector<8x1xf32>
    %122 = arith.mulf %121, %120 : vector<8x1xf32>
    %123 = arith.addf %118, %122 : vector<8x1xf32>
    %124 = arith.addf %96, %123 : vector<8x1xf32>
    %125 = vector.shape_cast %124 : vector<8x1xf32> to vector<1x8x1xf32>
    %cst_44 = arith.constant dense<0.000000e+00> : vector<1xf32>
    %126 = vector.multi_reduction <add>, %125, %cst_44 [1, 2] : vector<1x8x1xf32> to vector<1xf32>
    %127 = vector.shape_cast %126 : vector<1xf32> to vector<1x1x1xf32>
    %128 = vector.extract %127[0, 0, 0] : f32 from vector<1x1x1xf32>
    %129 = vector.broadcast %128 : f32 to vector<1x1xf32>
    %130 = arith.addf %4, %129 : vector<1x1xf32>
    %131 = vector.shape_cast %130 : vector<1x1xf32> to vector<1x1xf32>
    %132 = vector.broadcast %131 : vector<1x1xf32> to vector<8x128xf32>
    %c0_45 = arith.constant 0 : index
    %c0_46 = arith.constant 0 : index
    %c0_47 = arith.constant 0 : index
    %133 = vector.load %arg7[%c0_45, %c0_46, %c0_47] : memref<1x8x128xf32, #tpu.memory_space<vmem>>, vector<1x8x128xf32>
    %134 = vector.shape_cast %133 : vector<1x8x128xf32> to vector<8x128xf32>
    %135 = vector.shape_cast %132 : vector<8x128xf32> to vector<1x8x128xf32>
    tpu.vector_store %arg7[%c0_45, %c0_46, %c0_47], %135 {strides = array<i32>} : memref<1x8x128xf32, #tpu.memory_space<vmem>>, vector<1x8x128xf32>,
    return
  }
  func.func @transform_0(%arg0: i32) -> (i32, i32) {
    %c0_i32 = arith.constant 0 : i32
    %c0_i32_0 = arith.constant 0 : i32
    return %arg0, %c0_i32 : i32, i32
  }
  func.func @transform_1(%arg0: i32) -> (i32, i32) {
    %c0_i32 = arith.constant 0 : i32
    %c0_i32_0 = arith.constant 0 : i32
    return %arg0, %c0_i32 : i32, i32
  }
  func.func @transform_2(%arg0: i32) -> (i32, i32) {
    %c0_i32 = arith.constant 0 : i32
    %c0_i32_0 = arith.constant 0 : i32
    %c0_i32_1 = arith.constant 0 : i32
    return %c0_i32, %c0_i32_0 : i32, i32
  }
  func.func @transform_3(%arg0: i32) -> (i32, i32) {
    %c0_i32 = arith.constant 0 : i32
    %c0_i32_0 = arith.constant 0 : i32
    %c0_i32_1 = arith.constant 0 : i32
    return %c0_i32, %c0_i32_0 : i32, i32
  }
  func.func @transform_4(%arg0: i32) -> (i32, i32) {
    %c0_i32 = arith.constant 0 : i32
    %c0_i32_0 = arith.constant 0 : i32
    return %arg0, %c0_i32 : i32, i32
  }
  func.func @transform_5(%arg0: i32) -> (i32, i32) {
    %c0_i32 = arith.constant 0 : i32
    %c0_i32_0 = arith.constant 0 : i32
    %c0_i32_1 = arith.constant 0 : i32
    return %c0_i32, %c0_i32_0 : i32, i32
  }
  func.func @transform_6(%arg0: i32) -> (i32, i32, i32) {
    %c0_i32 = arith.constant 0 : i32
    %c0_i32_0 = arith.constant 0 : i32
    %c0_i32_1 = arith.constant 0 : i32
    return %arg0, %c0_i32, %c0_i32_0 : i32, i32, i32
  }
}

</mosaic_0001>

<llo_original>
// kernel: tpu_custom_call.1
$region0: #{tpu_custom_call.1}
  #allocation0 [shape = 'u32[]', space=smem, size = 0x4, offset = 0x4, fixed_abs, tag = 'smem constant byte address 0x4 - core index']
  #allocation1 [shape = 'u32[144,128]{1,0:T(1,128)}', space=vmem, size = 0x12000, scoped, tag = 'internal scratch']
  %s0 = inlined_call_operand.vmem [shape: f32[8,32], index: 0, kind: input, shape index: {}]
  %s1 = inlined_call_operand.vmem [shape: f32[8,32], index: 1, kind: input, shape index: {}]
  %s2 = inlined_call_operand.vmem [shape: f32[32,8], index: 2, kind: input, shape index: {}]
  %s3 = inlined_call_operand.vmem [shape: f32[32,8], index: 3, kind: input, shape index: {}]
  %s4 = inlined_call_operand.vmem [shape: s32[8,1], index: 4, kind: input, shape index: {}]
  %s5 = inlined_call_operand.vmem [shape: s32[1,8], index: 5, kind: input, shape index: {}]
  %s6 = inlined_call_operand.hbm [shape: f32[1,8,128], index: 6, kind: output, shape index: {}]
  %s7 = sld [smem:[#allocation0]]
  $region34: #{tpu_custom_call.1} parent=0
    _
  %s9 = ssub.s32 1, %s7
  %s10 = scalar_select 0, %s9, %s7
  $region1: #{tpu_custom_call.1} parent=0
    #allocation2 [shape = 'u8[4096]{0}', space=vmem, size = 0x1000, scoped, tag = 'output window, operand 0, single buffered']
    #allocation3 [shape = 's32[1]{0}', space=sflag, size = 0x4, scoped, tag = 'scoped memory for tpu_custom_call.1']
    %11 = vsyncpa [#allocation3], 0
    // Predicated region
    $region2: #{tpu_custom_call.1} parent=1 // pred_check
      _
    $region3: #{tpu_custom_call.1} parent=1 // pred_check_branch
      %13 = sbr.rel (0) target = $region5
    $region4: #{tpu_custom_call.1} parent=1 // pred_region
      _
    $region5: #{tpu_custom_call.1} parent=1 // pred_fallthru
      _
    // Predicated region
    $region6: #{tpu_custom_call.1} parent=1 // pred_check
      _
    $region7: #{tpu_custom_call.1} parent=1 // pred_check_branch
      %15 = sbr.rel (0) target = $region9
    $region8: #{tpu_custom_call.1} parent=1 // pred_region
      _
    $region9: #{tpu_custom_call.1} parent=1 // pred_fallthru
      _
    // Predicated region
    $region10: #{tpu_custom_call.1} parent=1 // pred_check
      _
    $region11: #{tpu_custom_call.1} parent=1 // pred_check_branch
      %17 = sbr.rel (0) target = $region13
    $region12: #{tpu_custom_call.1} parent=1 // pred_region
      _
    $region13: #{tpu_custom_call.1} parent=1 // pred_fallthru
      _
    // Predicated region
    $region14: #{tpu_custom_call.1} parent=1 // pred_check
      _
    $region15: #{tpu_custom_call.1} parent=1 // pred_check_branch
      %19 = sbr.rel (0) target = $region17
    $region16: #{tpu_custom_call.1} parent=1 // pred_region
      _
    $region17: #{tpu_custom_call.1} parent=1 // pred_fallthru
      _
    // Predicated region
    $region18: #{tpu_custom_call.1} parent=1 // pred_check
      _
    $region19: #{tpu_custom_call.1} parent=1 // pred_check_branch
      %21 = sbr.rel (0) target = $region21
    $region20: #{tpu_custom_call.1} parent=1 // pred_region
      _
    $region21: #{tpu_custom_call.1} parent=1 // pred_fallthru
      _
    // Predicated region
    $region22: #{tpu_custom_call.1} parent=1 // pred_check
      _
    $region23: #{tpu_custom_call.1} parent=1 // pred_check_branch
      %23 = sbr.rel (0) target = $region25
    $region24: #{tpu_custom_call.1} parent=1 // pred_region
      _
    $region25: #{tpu_custom_call.1} parent=1 // pred_fallthru
      _
    %v24 = vld [vmem:[%s2] sm:$0xff]
    %v25 = vld [vmem:[%s2 + $0x8] sm:$0xff]
    %v26 = vld [vmem:[%s2 + $0x10] sm:$0xff]
    %v27 = vld [vmem:[%s2 + $0x18] sm:$0xff]
    %v28 = vld [vmem:[%s3] sm:$0xff]
    %v29 = vld [vmem:[%s3 + $0x8] sm:$0xff]
    %v30 = vld [vmem:[%s3 + $0x10] sm:$0xff]
    %v31 = vld [vmem:[%s3 + $0x18] sm:$0xff]
    %v32 = vld [vmem:[%s5] sm:$0x1]
    %s33 = smul.u32 0, 8
    %v34 = vld [vmem:[%s0] sm:$0xff]
    %v35 = vld [vmem:[%s1] sm:$0xff]
    %vm36 = vcmask 261120
    %v38 = vsel %vm36, %v34, 0
    %40 = vmatprep.subr.mxu0 0.0
    %41 = vmatpush1.msra.mxu0 %v28
    %42 = vmatprep.subr.mxu0 0.0
    %43 = vmatpush1.msra.mxu0 %v29
    %44 = vmatprep.subr.mxu0 0.0
    %45 = vmatpush1.msra.mxu0 %v30
    %46 = vmatprep.subr.mxu0 0.0
    %47 = vmatpush1.msra.mxu0 %v31
    %48 = vmatprep.subr.mxu0 0.0
    %49 = vmatpush1.msra.mxu0 0.0
    %50 = vmatprep.subr.mxu0 0.0
    %51 = vmatpush1.msra.mxu0 0.0
    %52 = vmatprep.subr.mxu0 0.0
    %53 = vmatpush1.msra.mxu0 0.0
    %54 = vmatprep.subr.mxu0 0.0
    %55 = vmatpush1.msra.mxu0 0.0
    %56 = vmatprep.subr.mxu0 0.0
    %57 = vmatpush1.msra.mxu0 0.0
    %58 = vmatprep.subr.mxu0 0.0
    %59 = vmatpush1.msra.mxu0 0.0
    %60 = vmatprep.subr.mxu0 0.0
    %61 = vmatpush1.msra.mxu0 0.0
    %62 = vmatprep.subr.mxu0 0.0
    %63 = vmatpush1.msra.mxu0 0.0
    %64 = vmatprep.subr.mxu0 0.0
    %65 = vmatpush1.msra.mxu0 0.0
    %66 = vmatprep.subr.mxu0 0.0
    %67 = vmatpush1.msra.mxu0 0.0
    %68 = vmatprep.subr.mxu0 0.0
    %69 = vmatpush1.msra.mxu0 0.0
    %70 = vmatprep.subr.mxu0 0.0
    %71 = vmatpush1.msra.mxu0 0.0
    %72 = vmatprep.subr.mxu0 0.0
    %73 = vmatpush1.msra.mxu0 0.0
    %74 = vmatprep.subr.mxu0 0.0
    %75 = vmatpush1.msra.mxu0 0.0
    %76 = vmatprep.subr.mxu0 0.0
    %77 = vmatpush1.msra.mxu0 0.0
    %78 = vmatprep.subr.mxu0 0.0
    %79 = vmatpush1.msra.mxu0 0.0
    %80 = vmatprep.subr.mxu0 0.0
    %81 = vmatpush1.msra.mxu0 0.0
    %82 = vmatprep.subr.mxu0 0.0
    %83 = vmatpush1.msra.mxu0 0.0
    %84 = vmatprep.subr.mxu0 0.0
    %85 = vmatpush1.msra.mxu0 0.0
    %86 = vmatprep.subr.mxu0 0.0
    %87 = vmatpush1.msra.mxu0 0.0
    %88 = vmatprep.subr.mxu0 0.0
    %89 = vmatpush1.msra.mxu0 0.0
    %90 = vmatprep.subr.mxu0 0.0
    %91 = vmatpush1.msra.mxu0 0.0
    %92 = vmatprep.subr.mxu0 0.0
    %93 = vmatpush1.msra.mxu0 0.0
    %94 = vmatprep.subr.mxu0 0.0
    %95 = vmatpush1.msra.mxu0 0.0
    %96 = vmatprep.subr.mxu0 0.0
    %97 = vmatpush1.msra.mxu0 0.0
    %98 = vmatprep.subr.mxu0 0.0
    %99 = vmatpush1.msra.mxu0 0.0
    %100 = vmatprep.subr.mxu0 0.0
    %101 = vmatpush1.msra.mxu0 0.0
    %102 = vmatprep.subr.mxu0 0.0
    %103 = vmatpush1.msra.mxu0 0.0
    %104 = vmatprep.mubr.f32.mxu0 0.0
    %105 = vmatmul.mubr.f32.gmra.mrb[0].mxu0 %v38
    %v106 = vpop.f32.mrb[0].mxu0
    %v107 = vadd.f32 0.0, %v106
    %v108 = vpop.f32.mrb[0].mxu0
    %109 = vdwg.mxu0
    %v110 = vmul.f32 %v107, 2.0
    %v112 = vsel %vm36, %v35, 0
    %114 = vmatprep.subr.mxu0 0.0
    %115 = vmatpush1.msra.mxu0 %v24
    %116 = vmatprep.subr.mxu0 0.0
    %117 = vmatpush1.msra.mxu0 %v25
    %118 = vmatprep.subr.mxu0 0.0
    %119 = vmatpush1.msra.mxu0 %v26
    %120 = vmatprep.subr.mxu0 0.0
    %121 = vmatpush1.msra.mxu0 %v27
    %122 = vmatprep.subr.mxu0 0.0
    %123 = vmatpush1.msra.mxu0 0.0
    %124 = vmatprep.subr.mxu0 0.0
    %125 = vmatpush1.msra.mxu0 0.0
    %126 = vmatprep.subr.mxu0 0.0
    %127 = vmatpush1.msra.mxu0 0.0
    %128 = vmatprep.subr.mxu0 0.0
    %129 = vmatpush1.msra.mxu0 0.0
    %130 = vmatprep.subr.mxu0 0.0
    %131 = vmatpush1.msra.mxu0 0.0
    %132 = vmatprep.subr.mxu0 0.0
    %133 = vmatpush1.msra.mxu0 0.0
    %134 = vmatprep.subr.mxu0 0.0
    %135 = vmatpush1.msra.mxu0 0.0
    %136 = vmatprep.subr.mxu0 0.0
    %137 = vmatpush1.msra.mxu0 0.0
    %138 = vmatprep.subr.mxu0 0.0
    %139 = vmatpush1.msra.mxu0 0.0
    %140 = vmatprep.subr.mxu0 0.0
    %141 = vmatpush1.msra.mxu0 0.0
    %142 = vmatprep.subr.mxu0 0.0
    %143 = vmatpush1.msra.mxu0 0.0
    %144 = vmatprep.subr.mxu0 0.0
    %145 = vmatpush1.msra.mxu0 0.0
    %146 = vmatprep.subr.mxu0 0.0
    %147 = vmatpush1.msra.mxu0 0.0
    %148 = vmatprep.subr.mxu0 0.0
    %149 = vmatpush1.msra.mxu0 0.0
    %150 = vmatprep.subr.mxu0 0.0
    %151 = vmatpush1.msra.mxu0 0.0
    %152 = vmatprep.subr.mxu0 0.0
    %153 = vmatpush1.msra.mxu0 0.0
    %154 = vmatprep.subr.mxu0 0.0
    %155 = vmatpush1.msra.mxu0 0.0
    %156 = vmatprep.subr.mxu0 0.0
    %157 = vmatpush1.msra.mxu0 0.0
    %158 = vmatprep.subr.mxu0 0.0
    %159 = vmatpush1.msra.mxu0 0.0
    %160 = vmatprep.subr.mxu0 0.0
    %161 = vmatpush1.msra.mxu0 0.0
    %162 = vmatprep.subr.mxu0 0.0
    %163 = vmatpush1.msra.mxu0 0.0
    %164 = vmatprep.subr.mxu0 0.0
    %165 = vmatpush1.msra.mxu0 0.0
    %166 = vmatprep.subr.mxu0 0.0
    %167 = vmatpush1.msra.mxu0 0.0
    %168 = vmatprep.subr.mxu0 0.0
    %169 = vmatpush1.msra.mxu0 0.0
    %170 = vmatprep.subr.mxu0 0.0
    %171 = vmatpush1.msra.mxu0 0.0
    %172 = vmatprep.subr.mxu0 0.0
    %173 = vmatpush1.msra.mxu0 0.0
    %174 = vmatprep.subr.mxu0 0.0
    %175 = vmatpush1.msra.mxu0 0.0
    %176 = vmatprep.subr.mxu0 0.0
    %177 = vmatpush1.msra.mxu0 0.0
    %178 = vmatprep.mubr.f32.mxu0 0.0
    %179 = vmatmul.mubr.f32.gmra.mrb[0].mxu0 %v112
    %v180 = vpop.f32.mrb[0].mxu0
    %v181 = vadd.f32 0.0, %v180
    %v182 = vpop.f32.mrb[0].mxu0
    %183 = vdwg.mxu0
    %v184 = vmul.f32 %v181, 2.0
    %v185 = vlaneseq
    %v186 = vand.u32 %v185, 127
    %v187 = vlaneseq
    %v188 = vshrl.u32 %v187, 7
    %v189 = vstv %s33
    %v190 = vadd.s32 %v189, %v188
    %vm191 = vcmp.eq.s32.totalorder %v186, %v190
    %v192 = vld [vmem:[%s4] sm:$0xff]
    %193 = vset.pattern.permute.xlu0 0
    %194 = vperm.xlu0 %193, %v192
    %v195 = vpop.permute.xlu0 %194
    %v196 = vlaneseq
    %v197 = vshrl.u32 %v196, 7
    %v198 = vsub.s32 0, %v197
    %v199 = vrot.slane %v32, %v198
    %vm200 = vcmp.eq.s32.totalorder %v195, %v199
    %v201 = vsel %vm200, %v110, 0.0
    %v202 = vsel %vm191, -999.0, %v201
    %v203 = vmul.f32 %v34, %v35
    %v204 = vsel %vm36, %v203, 0.0
    %205 = vadd.xlane.f32.xlu0 %v204
    %v206 = vpop.xlane.xlu0 %205
    %v207 = vmul.f32 %v206, 2.0
    %vm208 = vcmask 64512
    %v209 = vsel %vm208, %v202, -inf
    %210 = vmax.xlane.f32.xlu0 %v209
    %v211 = vpop.xlane.xlu0 %210
    %vm212 = vcmp.eq.f32.partialorder %v202, %v211
    %v213 = vsel %vm212, %v186, 8
    %v214 = vsel %vm208, %v213, 2147483647
    %v215 = vand.u32 %v214, 65535
    %v216 = vshra.s32 %v214, 16
    %v217 = vcvt.s32.f32 %v215
    %v218 = vcvt.s32.f32 %v216
    %219 = vmin.xlane.f32.xlu0 %v218
    %v220 = vpop.xlane.xlu0 %219
    %vm221 = vcmp.eq.f32.partialorder %v218, %v220
    %v222 = vsel %vm221, %v217, inf
    %223 = vmin.xlane.f32.xlu0 %v222
    %v224 = vpop.xlane.xlu0 %223
    %v225 = vcvt.f32.s32 %v224
    %v226 = vcvt.f32.s32 %v220
    %v227 = vshll.u32 %v226, 16
    %v228 = vadd.s32 %v227, %v225
    %vm229 = vcmp.eq.s32.totalorder %v186, %v228
    %v230 = vsel %vm229, %v110, 0.0
    %v231 = vsel %vm208, %v230, 0.0
    %232 = vadd.xlane.f32.xlu0 %v231
    %v233 = vpop.xlane.xlu0 %232
    %v234 = vsel %vm229, %v184, 0.0
    %v235 = vsel %vm208, %v234, 0.0
    %236 = vadd.xlane.f32.xlu0 %v235
    %v237 = vpop.xlane.xlu0 %236
    %v238 = vsel %vm229, -1e+30, %v202
    %v239 = vsel %vm208, %v238, -inf
    %240 = vmax.xlane.f32.xlu0 %v239
    %v241 = vpop.xlane.xlu0 %240
    %vm242 = vcmp.eq.f32.partialorder %v238, %v241
    %v243 = vsel %vm242, %v186, 8
    %v244 = vsel %vm208, %v243, 2147483647
    %v245 = vand.u32 %v244, 65535
    %v246 = vshra.s32 %v244, 16
    %v247 = vcvt.s32.f32 %v245
    %v248 = vcvt.s32.f32 %v246
    %249 = vmin.xlane.f32.xlu0 %v248
    %v250 = vpop.xlane.xlu0 %249
    %vm251 = vcmp.eq.f32.partialorder %v248, %v250
    %v252 = vsel %vm251, %v247, inf
    %253 = vmin.xlane.f32.xlu0 %v252
    %v254 = vpop.xlane.xlu0 %253
    %v255 = vcvt.f32.s32 %v254
    %v256 = vcvt.f32.s32 %v250
    %v257 = vshll.u32 %v256, 16
    %v258 = vadd.s32 %v257, %v255
    %vm259 = vcmp.eq.s32.totalorder %v186, %v258
    %v260 = vsel %vm259, %v110, 0.0
    %v261 = vsel %vm208, %v260, 0.0
    %262 = vadd.xlane.f32.xlu0 %v261
    %v263 = vpop.xlane.xlu0 %262
    %v264 = vsel %vm259, %v184, 0.0
    %v265 = vsel %vm208, %v264, 0.0
    %266 = vadd.xlane.f32.xlu0 %v265
    %v267 = vpop.xlane.xlu0 %266
    %v268 = vmax.f32 %v207, 0.0
    %v269 = vadd.f32 %v207, %v233
    %v270 = vmax.f32 %v268, %v233
    %v271 = vadd.f32 %v269, %v263
    %v272 = vmax.f32 %v270, %v263
    %v273 = vsub.f32 0.0, %v272
    %v274 = vmul.f32 %v273, 1.442695
    %v275 = vpow.pop %v274
    %v276 = vmul.f32 %v275, 12.0
    %v277 = vsub.f32 %v207, %v272
    %v278 = vmul.f32 %v277, 1.442695
    %v279 = vpow.pop %v278
    %v280 = vadd.f32 %v276, %v279
    %v281 = vsub.f32 %v233, %v272
    %v282 = vmul.f32 %v281, 1.442695
    %v283 = vpow.pop %v282
    %v284 = vadd.f32 %v280, %v283
    %v285 = vsub.f32 %v263, %v272
    %v286 = vmul.f32 %v285, 1.442695
    %v287 = vpow.pop %v286
    %v288 = vadd.f32 %v284, %v287
    %v289 = vsub.f32 0.0, %v271
    %v290 = vlog2.pop %v288
    %v291 = vmul.f32 %v290, 0.6931472
    %v292 = vadd.f32 %v272, %v291
    %v293 = vmul.f32 %v292, 3.0
    %v294 = vadd.f32 %v289, %v293
    %v295 = vadd.f32 %v207, %v237
    %v296 = vmax.f32 %v268, %v237
    %v297 = vadd.f32 %v295, %v267
    %v298 = vmax.f32 %v296, %v267
    %v299 = vsub.f32 0.0, %v298
    %v300 = vmul.f32 %v299, 1.442695
    %v301 = vpow.pop %v300
    %v302 = vmul.f32 %v301, 12.0
    %v303 = vsub.f32 %v207, %v298
    %v304 = vmul.f32 %v303, 1.442695
    %v305 = vpow.pop %v304
    %v306 = vadd.f32 %v302, %v305
    %v307 = vsub.f32 %v237, %v298
    %v308 = vmul.f32 %v307, 1.442695
    %v309 = vpow.pop %v308
    %v310 = vadd.f32 %v306, %v309
    %v311 = vsub.f32 %v267, %v298
    %v312 = vmul.f32 %v311, 1.442695
    %v313 = vpow.pop %v312
    %v314 = vadd.f32 %v310, %v313
    %v315 = vsub.f32 0.0, %v297
    %v316 = vlog2.pop %v314
    %v317 = vmul.f32 %v316, 0.6931472
    %v318 = vadd.f32 %v298, %v317
    %v319 = vmul.f32 %v318, 3.0
    %v320 = vadd.f32 %v315, %v319
    %v321 = vadd.f32 %v294, %v320
    %vm322 = vcmask 7168
    %v323 = vsel %vm322, %v321, 0.0
    %324 = vadd.xlane.f32.xlu0 %v323
    %v325 = vpop.xlane.xlu0 %324
    %v326 = vrot.slane %v325, 4
    %v327 = vadd.f32 %v325, %v326
    %v328 = vrot.slane %v327, 2
    %v329 = vadd.f32 %v327, %v328
    %v330 = vrot.slane %v329, 1
    %v331 = vadd.f32 %v329, %v330
    %s332 = vtos %v331
    %v333 = vstv %s332
    %v334 = vadd.f32 %v333, 0.0
    %335 = vst [vmem:[#allocation2] sm:$0xff] %v334
    // Predicated region
    $region26: #{tpu_custom_call.1} parent=1 // pred_check
      _
    $region27: #{tpu_custom_call.1} parent=1 // pred_check_branch
      %337 = sbr.rel (0) target = $region29
    $region28: #{tpu_custom_call.1} parent=1 // pred_region
      %s339 = ssub.s32 128, 128
      %340 = vsyncadd [#allocation3], %s339
      %s342 = sshll.u32 [#allocation2], 4
      %s343 = int_to_ptr.vmem [resolvable:$true] %s342
      %345 = dma.vmem_to_hbm [thread:$0]  %s343, 128, %s6, [#allocation3]
    $region29: #{tpu_custom_call.1} parent=1 // pred_fallthru
      _
    // Predicated region
    $region30: #{tpu_custom_call.1} parent=1 // pred_check
      _
    $region31: #{tpu_custom_call.1} parent=1 // pred_check_branch
      %347 = sbr.rel (0) target = $region33
    $region32: #{tpu_custom_call.1} parent=1 // pred_region
      %348 = dma.done [#allocation3], 128
    $region33: #{tpu_custom_call.1} parent=1 // pred_fallthru
      _
    %349 = vsyncpa [#allocation3], 1

</llo_original>
